<compile_context>
chip_gen: v7x
topology: tpu7x:2x2x1
jax: 0.10.0
libtpu: 0.0.40
codegen_flags: <defaults>
</compile_context>

<pallas_src>
import jax
import jax.numpy as jnp
from jax.experimental import pallas as pl
from jax.experimental.pallas import tpu as pltpu


def _round_up(x, m):
    return (x + m - 1) // m * m


def mlp_kernel(x_ref, w_ref, b_ref, o_ref):
    # x_ref: (TB, F) VMEM batch tile
    # w_ref: (1, F)  VMEM weight row, resident across all grid steps
    # b_ref: (1, 1)  SMEM scalar bias
    # o_ref: (TB, 1) VMEM output tile
    x = x_ref[...].astype(jnp.float32)            # upcast (no-op for f32; enables bf16 inputs)
    w = w_ref[...].astype(jnp.float32)            # broadcasts over batch rows
    p = jnp.sum(x * w, axis=1, keepdims=True)     # VPU mul + XLU cross-lane reduce
    o_ref[...] = p + b_ref[0, 0]                  # scalar bias add


def mlp_forward(x, weights, bias, *, block_b=1024):
    """x: (B, F) float; weights: (F,) f32; bias: (1,) f32 -> (B, 1) f32."""
    B, F = x.shape

    # Batch tile: multiple of 8 (sublane), capped so double-buffered x tiles fit
    # comfortably in VMEM on every generation (TB=1024 f32 -> ~6.4 MiB of x buffers;
    # safe even for v7x's 64 MiB VMEM).
    tb = min(_round_up(max(B, 1), 8), block_b)
    b_pad = _round_up(B, tb)
    if b_pad != B:
        # Padded rows produce (bias-only) garbage which we strip below.
        x = jnp.pad(x, ((0, b_pad - B), (0, 0)))

    w2d = weights.reshape(1, F).astype(jnp.float32)
    b2d = bias.reshape(1, 1).astype(jnp.float32)

    grid_b = b_pad // tb
    itemsize = jnp.dtype(x.dtype).itemsize
    # 2x double-buffered x tile + 2x out tile + 2x resident weight row + slack.
    vmem_bytes = 2 * (tb * F * itemsize) + 2 * (tb * 4) + 2 * (F * 4) + (4 << 20)

    out = pl.pallas_call(
        mlp_kernel,
        out_shape=jax.ShapeDtypeStruct((b_pad, 1), jnp.float32),
        grid_spec=pltpu.PrefetchScalarGridSpec(
            num_scalar_prefetch=0,
            grid=(grid_b,),
            in_specs=[
                pl.BlockSpec((tb, F), lambda i: (i, 0)),   # x: tiled over batch
                pl.BlockSpec((1, F), lambda i: (0, 0)),    # weights: stay resident
                pl.BlockSpec(memory_space=pltpu.SMEM),     # scalar bias
            ],
            out_specs=pl.BlockSpec((tb, 1), lambda i: (i, 0)),
        ),
        compiler_params=pltpu.CompilerParams(
            dimension_semantics=("parallel",),             # independent batch tiles (2 TCs on v7x)
            vmem_limit_bytes=int(vmem_bytes),
        ),
        cost_estimate=pl.CostEstimate(
            flops=2 * b_pad * F,
            transcendentals=0,
            bytes_accessed=b_pad * F * itemsize + F * 4 + b_pad * 4,
        ),
    )(x, w2d, b2d)
    return out[:B]


if __name__ == "__main__":
    key = jax.random.PRNGKey(0)
    kx, kw, kb = jax.random.split(key, 3)

    B, F = 2, 784  # MNIST flattened features, small batch
    x = jax.random.normal(kx, (B, F), dtype=jnp.float32)
    # nn.init.uniform_ defaults to U[0, 1)
    weights = jax.random.uniform(kw, (F,), dtype=jnp.float32)
    bias = jax.random.uniform(kb, (1,), dtype=jnp.float32)

    out = mlp_forward(x, weights, bias)
    jax.block_until_ready(out)

    ref = (x * weights[None, :]).sum(axis=1, keepdims=True) + bias[0]
    assert out.shape == (B, 1)
    assert jnp.allclose(out, ref, atol=1e-4, rtol=1e-4)

    # Second check exercising the multi-tile / padded-batch path (3 grid steps).
    B2 = 20
    x2 = jax.random.normal(kx, (B2, F), dtype=jnp.float32)
    out2 = mlp_forward(x2, weights, bias, block_b=8)
    jax.block_until_ready(out2)
    ref2 = (x2 * weights[None, :]).sum(axis=1, keepdims=True) + bias[0]
    assert out2.shape == (B2, 1)
    assert jnp.allclose(out2, ref2, atol=1e-4, rtol=1e-4)

    print("KERNEL_OK")
</pallas_src>

<mosaic_0001>
module attributes {stable_mosaic.version = 11 : i64} {
  func.func @mlp_kernel(%arg0: i32, %arg1: memref<8x784xf32, #tpu.memory_space<vmem>>, %arg2: memref<1x784xf32, #tpu.memory_space<vmem>>, %arg3: memref<1x1xf32, #tpu.memory_space<smem>>, %arg4: memref<8x1xf32, #tpu.memory_space<vmem>>) attributes {dimension_semantics = [#tpu.dimension_semantics<parallel>], iteration_bounds = array<i64: 1>, scalar_prefetch = 0 : i64, scratch_operands = 0 : i64, tpu.core_type = #tpu.core_type<tc>, window_params = [{transform_indices = @transform_0, window_bounds = array<i64: 8, 784>}, {pipeline_mode = #tpu.pipeline_mode<synchronous>, transform_indices = @transform_1, window_bounds = array<i64: 1, 784>}, {transform_indices = @transform_2, window_bounds = array<i64: 1, 1>}, {transform_indices = @transform_3, window_bounds = array<i64: 8, 1>}]} {
    %c0 = arith.constant 0 : index
    %c0_0 = arith.constant 0 : index
    %0 = vector.load %arg1[%c0, %c0_0] : memref<8x784xf32, #tpu.memory_space<vmem>>, vector<8x784xf32>
    %c0_1 = arith.constant 0 : index
    %c0_2 = arith.constant 0 : index
    %1 = vector.load %arg2[%c0_1, %c0_2] : memref<1x784xf32, #tpu.memory_space<vmem>>, vector<1x784xf32>
    %2 = vector.broadcast %1 : vector<1x784xf32> to vector<8x784xf32>
    %3 = arith.mulf %0, %2 : vector<8x784xf32>
    %cst = arith.constant dense<0.000000e+00> : vector<8xf32>
    %4 = vector.multi_reduction <add>, %3, %cst [1] : vector<8x784xf32> to vector<8xf32>
    %5 = vector.shape_cast %4 : vector<8xf32> to vector<8x1xf32>
    %c0_3 = arith.constant 0 : index
    %c0_4 = arith.constant 0 : index
    %6 = memref.load %arg3[%c0_3, %c0_4] : memref<1x1xf32, #tpu.memory_space<smem>>
    %7 = vector.broadcast %6 : f32 to vector<8x1xf32>
    %8 = arith.addf %5, %7 : vector<8x1xf32>
    %c0_5 = arith.constant 0 : index
    %c0_6 = arith.constant 0 : index
    %9 = vector.load %arg4[%c0_5, %c0_6] : memref<8x1xf32, #tpu.memory_space<vmem>>, vector<8x1xf32>
    tpu.vector_store %arg4[%c0_5, %c0_6], %8 {strides = array<i32>} : memref<8x1xf32, #tpu.memory_space<vmem>>, vector<8x1xf32>,
    return
  }
  func.func @transform_0(%arg0: i32) -> (i32, i32) {
    %c0_i32 = arith.constant 0 : i32
    %c0_i32_0 = arith.constant 0 : i32
    return %arg0, %c0_i32 : i32, i32
  }
  func.func @transform_1(%arg0: i32) -> (i32, i32) {
    %c0_i32 = arith.constant 0 : i32
    %c0_i32_0 = arith.constant 0 : i32
    %c0_i32_1 = arith.constant 0 : i32
    return %c0_i32, %c0_i32_0 : i32, i32
  }
  func.func @transform_2(%arg0: i32) -> (i32, i32) {
    %c0_i32 = arith.constant 0 : i32
    %c0_i32_0 = arith.constant 0 : i32
    %c0_i32_1 = arith.constant 0 : i32
    return %c0_i32, %c0_i32_0 : i32, i32
  }
  func.func @transform_3(%arg0: i32) -> (i32, i32) {
    %c0_i32 = arith.constant 0 : i32
    %c0_i32_0 = arith.constant 0 : i32
    return %arg0, %c0_i32 : i32, i32
  }
}

</mosaic_0001>

<llo_original>
// kernel: tpu_custom_call.1
$region0: #{tpu_custom_call.1}
  #allocation0 [shape = 'u32[]', space=smem, size = 0x4, offset = 0x4, fixed_abs, tag = 'smem constant byte address 0x4 - core index']
  #allocation1 [shape = 'u32[144,128]{1,0:T(1,128)}', space=vmem, size = 0x12000, scoped, tag = 'internal scratch']
  #allocation2 [shape = 'f32[1,1]{1,0:T(1,128)S(6)}', space=smem, size = 0x200, scoped, tag = 'scoped memory for tpu_custom_call.1']
  %s0 = inlined_call_operand.hbm [shape: f32[8,784], index: 0, kind: input, shape index: {}]
  %s1 = inlined_call_operand.vmem [shape: f32[1,784], index: 1, kind: input, shape index: {}]
  %s2 = inlined_call_operand.<no memory space> [shape: f32[1,1], index: 2, kind: input, shape index: {}]
  %s3 = inlined_call_operand.vmem [shape: f32[8,1], index: 3, kind: output, shape index: {}]
  %s4 = sld [smem:[#allocation0]]
  $region26: #{tpu_custom_call.1} parent=0
    _
  %s6 = ssub.s32 1, %s4
  %s7 = scalar_select 0, %s6, %s4
  %8 = sst [smem:[#allocation2]] %s2
  $region1: #{tpu_custom_call.1} parent=0
    #allocation3 [shape = 'u8[28672]{0}', space=vmem, size = 0x7000, scoped, tag = 'input window, operand 0, single buffered']
    #allocation4 [shape = 's32[1]{0}', space=sflag, size = 0x4, scoped, tag = 'scoped memory for tpu_custom_call.1']
    %9 = vsyncpa [#allocation4], 0
    // Predicated region
    $region2: #{tpu_custom_call.1} parent=1 // pred_check
      _
    $region3: #{tpu_custom_call.1} parent=1 // pred_check_branch
      %11 = sbr.rel (0) target = $region5
    $region4: #{tpu_custom_call.1} parent=1 // pred_region
      %s13 = ssub.s32 896, 896
      %14 = vsyncadd [#allocation4], %s13
      %s16 = sshll.u32 [#allocation3], 4
      %s17 = int_to_ptr.vmem [resolvable:$true] %s16
      %19 = dma.hbm_to_vmem [thread:$0]  %s0, 896, %s17, [#allocation4]
    $region5: #{tpu_custom_call.1} parent=1 // pred_fallthru
      _
    // Predicated region
    $region6: #{tpu_custom_call.1} parent=1 // pred_check
      _
    $region7: #{tpu_custom_call.1} parent=1 // pred_check_branch
      %21 = sbr.rel (0) target = $region9
    $region8: #{tpu_custom_call.1} parent=1 // pred_region
      _
    $region9: #{tpu_custom_call.1} parent=1 // pred_fallthru
      _
    // Predicated region
    $region10: #{tpu_custom_call.1} parent=1 // pred_check
      _
    $region11: #{tpu_custom_call.1} parent=1 // pred_check_branch
      %23 = sbr.rel (0) target = $region13
    $region12: #{tpu_custom_call.1} parent=1 // pred_region
      _
    $region13: #{tpu_custom_call.1} parent=1 // pred_fallthru
      _
    // Predicated region
    $region14: #{tpu_custom_call.1} parent=1 // pred_check
      _
    $region15: #{tpu_custom_call.1} parent=1 // pred_check_branch
      %25 = sbr.rel (0) target = $region17
    $region16: #{tpu_custom_call.1} parent=1 // pred_region
      %26 = dma.done [#allocation4], 896
    $region17: #{tpu_custom_call.1} parent=1 // pred_fallthru
      _
    %v27 = vld [vmem:[#allocation3] sm:$0xff]
    %v28 = vld [vmem:[#allocation3 + $0x8] sm:$0xff]
    %v29 = vld [vmem:[#allocation3 + $0x10] sm:$0xff]
    %v30 = vld [vmem:[#allocation3 + $0x18] sm:$0xff]
    %v31 = vld [vmem:[#allocation3 + $0x20] sm:$0xff]
    %v32 = vld [vmem:[#allocation3 + $0x28] sm:$0xff]
    %v33 = vld [vmem:[#allocation3 + $0x30] sm:$0xff]
    %v34 = vld [vmem:[%s1] sm:$0x7f]
    %v36 = vlaneseq
    %v37 = vshrl.u32 %v36, 7
    %v38 = vsub.s32 0, %v37
    %v39 = vrot.slane %v34, %v38
    %v40 = vlaneseq
    %v41 = vshrl.u32 %v40, 7
    %v42 = vsub.s32 1, %v41
    %v43 = vrot.slane %v34, %v42
    %v44 = vlaneseq
    %v45 = vshrl.u32 %v44, 7
    %v46 = vsub.s32 2, %v45
    %v47 = vrot.slane %v34, %v46
    %v48 = vlaneseq
    %v49 = vshrl.u32 %v48, 7
    %v50 = vsub.s32 3, %v49
    %v51 = vrot.slane %v34, %v50
    %v52 = vlaneseq
    %v53 = vshrl.u32 %v52, 7
    %v54 = vsub.s32 4, %v53
    %v55 = vrot.slane %v34, %v54
    %v56 = vlaneseq
    %v57 = vshrl.u32 %v56, 7
    %v58 = vsub.s32 5, %v57
    %v59 = vrot.slane %v34, %v58
    %v60 = vlaneseq
    %v61 = vshrl.u32 %v60, 7
    %v62 = vsub.s32 6, %v61
    %v63 = vrot.slane %v34, %v62
    %v71 = vmul.f32 %v27, %v39
    %v72 = vmul.f32 %v28, %v43
    %v73 = vmul.f32 %v29, %v47
    %v74 = vmul.f32 %v30, %v51
    %v75 = vmul.f32 %v31, %v55
    %v76 = vmul.f32 %v32, %v59
    %v77 = vmul.f32 %v33, %v63
    %v78 = vadd.f32 %v71, %v72
    %v79 = vadd.f32 %v78, %v73
    %v80 = vadd.f32 %v79, %v74
    %v81 = vadd.f32 %v80, %v75
    %v82 = vadd.f32 %v81, %v76
    %vm83 = vcmask 130048
    %v84 = vsel %vm83, %v77, 0.0
    %v85 = vadd.f32 %v82, %v84
    %86 = vadd.xlane.f32.xlu0 %v85
    %v87 = vpop.xlane.xlu0 %86
    %s88 = sld [smem:[#allocation2]]
    %v89 = vstv %s88
    %v90 = vadd.f32 %v87, %v89
    %vm91 = vcmask 7168
    %92 = vst.msk [vmem:[%s3] sm:$0xff] %vm91, %v90
    // Predicated region
    $region18: #{tpu_custom_call.1} parent=1 // pred_check
      _
    $region19: #{tpu_custom_call.1} parent=1 // pred_check_branch
      %94 = sbr.rel (0) target = $region21
    $region20: #{tpu_custom_call.1} parent=1 // pred_region
      _
    $region21: #{tpu_custom_call.1} parent=1 // pred_fallthru
      _
    // Predicated region
    $region22: #{tpu_custom_call.1} parent=1 // pred_check
      _
    $region23: #{tpu_custom_call.1} parent=1 // pred_check_branch
      %96 = sbr.rel (0) target = $region25
    $region24: #{tpu_custom_call.1} parent=1 // pred_region
      _
    $region25: #{tpu_custom_call.1} parent=1 // pred_fallthru
      _
    %97 = vsyncpa [#allocation4], 1

</llo_original>
